<compile_context>
chip_gen: v7x
topology: tpu7x:2x2x1
jax: 0.10.0
libtpu: 0.0.40
codegen_flags: <defaults>
</compile_context>

<pallas_src>
import math
import jax
import jax.numpy as jnp
from jax.experimental import pallas as pl
from jax.experimental.pallas import tpu as pltpu


def _round_up(x, m):
    return (x + m - 1) // m * m


def _pick_tile(dim_padded, pref, unit):
    """Largest multiple of `unit` that divides `dim_padded` and is <= pref."""
    t = min(pref, dim_padded)
    t = max(unit, (t // unit) * unit)
    while dim_padded % t != 0:
        t -= unit
    return t


def _linrelu_kernel(x_ref, b_ref, w_ref, o_ref, acc_ref):
    # x_ref: (tm, tk) bf16, b_ref: (1, tk) f32, w_ref: (tk, tn) bf16
    # o_ref: (tm, tn) f32,  acc_ref: (tm, tn) f32 VMEM scratch
    k = pl.program_id(2)

    @pl.when(k == 0)
    def _():
        acc_ref[...] = jnp.zeros_like(acc_ref)

    # Fused per-K-tile bias subtract: f32 subtract on the VPU (free filler under
    # MXU/DMA), then bf16 for the MXU with f32 accumulation.
    xb = (x_ref[...].astype(jnp.float32) - b_ref[...]).astype(jnp.bfloat16)
    acc_ref[...] += jnp.dot(xb, w_ref[...], preferred_element_type=jnp.float32)

    @pl.when(k == pl.num_programs(2) - 1)
    def _():
        o_ref[...] = jnp.maximum(acc_ref[...], 0.0).astype(o_ref.dtype)


def prepare_params(weights, bias):
    """One-time (init-time) prep: cast weights to bf16 and zero-pad (K, N) to
    multiples of 128; bias padded to Kp, kept f32. Zero K-padding contributes
    nothing to the dot; N padding is sliced off from the output."""
    K, N = weights.shape
    assert bias.shape == (K,)
    Kp = _round_up(K, 128)
    Np = _round_up(N, 128)
    wp = jnp.zeros((Kp, Np), jnp.bfloat16).at[:K, :N].set(
        weights.astype(jnp.bfloat16))
    bp = jnp.zeros((1, Kp), jnp.float32).at[:, :K].set(
        bias.astype(jnp.float32))
    return wp, bp, N


def linrelu(x, w_prepped, b_prepped, n_out, *,
            tm_pref=256, tn_pref=512, tk_pref=512):
    """x: (M, K) f32; w_prepped: (Kp, Np) bf16; b_prepped: (1, Kp) f32 -> (M, n_out) f32."""
    M, K = x.shape
    Kp, Np = w_prepped.shape
    assert b_prepped.shape == (1, Kp)
    assert K <= Kp and n_out <= Np

    Mp = _round_up(M, 8)

    # Only the activation is touched per call: bf16 cast (halves HBM traffic) and
    # a zero pad only when the shape actually needs it (padded rows/cols sliced /
    # contribute zero).
    x_bf = x.astype(jnp.bfloat16)
    if (Mp, Kp) != (M, K):
        xp = jnp.zeros((Mp, Kp), jnp.bfloat16).at[:M, :K].set(x_bf)
    else:
        xp = x_bf

    tm = _pick_tile(Mp, tm_pref, 8)
    tk = _pick_tile(Kp, tk_pref, 128)
    tn = _pick_tile(Np, tn_pref, 128)

    # v7x megacore: make sure both TensorCores get work when the natural grid is
    # a single parallel tile and N is wide enough to split.
    if (Mp // tm) * (Np // tn) < 2 and Np >= 256:
        tn = _pick_tile(Np, Np // 2, 128)

    grid = (Mp // tm, Np // tn, Kp // tk)

    out_padded = pl.pallas_call(
        _linrelu_kernel,
        out_shape=jax.ShapeDtypeStruct((Mp, Np), jnp.float32),
        grid_spec=pltpu.PrefetchScalarGridSpec(
            num_scalar_prefetch=0,
            grid=grid,
            in_specs=[
                pl.BlockSpec((tm, tk), lambda i, j, k: (i, k)),   # x tile (bf16)
                pl.BlockSpec((1, tk), lambda i, j, k: (0, k)),    # bias tile (f32)
                pl.BlockSpec((tk, tn), lambda i, j, k: (k, j)),   # w tile (bf16)
            ],
            out_specs=pl.BlockSpec((tm, tn), lambda i, j, k: (i, j)),
            scratch_shapes=[pltpu.VMEM((tm, tn), jnp.float32)],
        ),
        compiler_params=pltpu.CompilerParams(
            dimension_semantics=("parallel", "parallel", "arbitrary"),
            vmem_limit_bytes=48 * 1024 * 1024,  # under 64 MiB v7x / 128 MiB v5e,v6e
        ),
    )(xp, b_prepped, w_prepped)

    return out_padded[:M, :n_out]


def init_params(key, in_features, out_features):
    kw, kb = jax.random.split(key)
    # Xavier-uniform weights (in_features, out_features)
    limit = math.sqrt(6.0 / (in_features + out_features))
    weights = jax.random.uniform(
        kw, (in_features, out_features), minval=-limit, maxval=limit,
        dtype=jnp.float32)
    # Truncated normal bias (std=0.5, truncated at +/-2 std)
    bias = 0.5 * jax.random.truncated_normal(
        kb, -2.0, 2.0, (in_features,), dtype=jnp.float32)
    return weights, bias


def _reference_f32(x, bias, weights):
    return jnp.maximum((x - bias[None, :]) @ weights, 0.0)


def _reference_matched(x, bias, weights):
    # Same rounding steps as the kernel: bf16 x, f32 subtract, bf16 into the MXU,
    # f32 accumulate.
    xb = x.astype(jnp.bfloat16).astype(jnp.float32) - bias[None, :]
    xb = xb.astype(jnp.bfloat16).astype(jnp.float32)
    w = weights.astype(jnp.bfloat16).astype(jnp.float32)
    return jnp.maximum(xb @ w, 0.0)


if __name__ == "__main__":
    key = jax.random.PRNGKey(0)
    k_x, k_p, k_x2, k_p2 = jax.random.split(key, 4)

    # Small shapes consistent with the module's linear layer.
    batch, in_features, out_features = 8, 32, 64
    x = jax.random.normal(k_x, (batch, in_features), dtype=jnp.float32)
    weights, bias = init_params(k_p, in_features, out_features)
    wp, bp, n_out = prepare_params(weights, bias)

    out = jax.block_until_ready(linrelu(x, wp, bp, n_out))
    assert out.shape == (batch, out_features)
    ref_m = _reference_matched(x, bias, weights)
    assert jnp.allclose(out, ref_m, atol=2e-2, rtol=2e-2), float(
        jnp.max(jnp.abs(out - ref_m)))
    ref_f = _reference_f32(x, bias, weights)
    assert jnp.allclose(out, ref_f, atol=2e-1, rtol=0), float(
        jnp.max(jnp.abs(out - ref_f)))

    # Secondary check: multi-tile grid with K accumulation (grid_k > 1), megacore
    # N split, and M/K/N padding paths.
    M2, K2, N2 = 200, 300, 260
    x2 = jax.random.normal(k_x2, (M2, K2), dtype=jnp.float32)
    w2, b2 = init_params(k_p2, K2, N2)
    wp2, bp2, n2 = prepare_params(w2, b2)
    out2 = jax.block_until_ready(linrelu(x2, wp2, bp2, n2, tk_pref=128))
    assert out2.shape == (M2, N2)
    ref2 = _reference_matched(x2, b2, w2)
    assert jnp.allclose(out2, ref2, atol=3e-2, rtol=2e-2), float(
        jnp.max(jnp.abs(out2 - ref2)))

    print("KERNEL_OK")
</pallas_src>

<mosaic_0001>
module attributes {stable_mosaic.version = 11 : i64} {
  func.func @_linrelu_kernel(%arg0: i32, %arg1: i32, %arg2: i32, %arg3: memref<8x128xbf16, #tpu.memory_space<vmem>>, %arg4: memref<1x128xf32, #tpu.memory_space<vmem>>, %arg5: memref<128x128xbf16, #tpu.memory_space<vmem>>, %arg6: memref<8x128xf32, #tpu.memory_space<vmem>>, %arg7: memref<8x128xf32, #tpu.memory_space<vmem>>) attributes {dimension_semantics = [#tpu.dimension_semantics<parallel>, #tpu.dimension_semantics<parallel>, #tpu.dimension_semantics<arbitrary>], iteration_bounds = array<i64: 1, 1, 1>, scalar_prefetch = 0 : i64, scratch_operands = 1 : i64, tpu.core_type = #tpu.core_type<tc>, window_params = [{transform_indices = @transform_0, window_bounds = array<i64: 8, 128>}, {transform_indices = @transform_1, window_bounds = array<i64: 1, 128>}, {transform_indices = @transform_2, window_bounds = array<i64: 128, 128>}, {transform_indices = @transform_3, window_bounds = array<i64: 8, 128>}]} {
    %c0_i32 = arith.constant 0 : i32
    %0 = arith.cmpi eq, %arg2, %c0_i32 : i32
    %1 = arith.extui %0 : i1 to i32
    %c0_i32_0 = arith.constant 0 : i32
    %2 = arith.cmpi ne, %1, %c0_i32_0 : i32
    scf.if %2 {
      %cst_12 = arith.constant 0.000000e+00 : f32
      %17 = vector.broadcast %cst_12 : f32 to vector<8x128xf32>
      %c0_13 = arith.constant 0 : index
      %c0_14 = arith.constant 0 : index
      %18 = vector.load %arg7[%c0_13, %c0_14] : memref<8x128xf32, #tpu.memory_space<vmem>>, vector<8x128xf32>
      tpu.vector_store %arg7[%c0_13, %c0_14], %17 {strides = array<i32>} : memref<8x128xf32, #tpu.memory_space<vmem>>, vector<8x128xf32>,
    } else {
    }
    %c0 = arith.constant 0 : index
    %c0_1 = arith.constant 0 : index
    %3 = vector.load %arg3[%c0, %c0_1] : memref<8x128xbf16, #tpu.memory_space<vmem>>, vector<8x128xbf16>
    %4 = arith.extf %3 : vector<8x128xbf16> to vector<8x128xf32>
    %c0_2 = arith.constant 0 : index
    %c0_3 = arith.constant 0 : index
    %5 = vector.load %arg4[%c0_2, %c0_3] : memref<1x128xf32, #tpu.memory_space<vmem>>, vector<1x128xf32>
    %6 = vector.broadcast %5 : vector<1x128xf32> to vector<8x128xf32>
    %7 = arith.subf %4, %6 : vector<8x128xf32>
    %8 = arith.truncf %7 : vector<8x128xf32> to vector<8x128xbf16>
    %c0_4 = arith.constant 0 : index
    %c0_5 = arith.constant 0 : index
    %9 = vector.load %arg7[%c0_4, %c0_5] : memref<8x128xf32, #tpu.memory_space<vmem>>, vector<8x128xf32>
    %c0_6 = arith.constant 0 : index
    %c0_7 = arith.constant 0 : index
    %10 = vector.load %arg5[%c0_6, %c0_7] : memref<128x128xbf16, #tpu.memory_space<vmem>>, vector<128x128xbf16>
    %cst = arith.constant dense<0.000000e+00> : vector<8x128xf32>
    %11 = tpu.matmul %8, %10, %cst {dimension_numbers = #tpu.dot_dimension_numbers<[1], [0], [0], [1], [0, 0, 1, 1], [], []>} : vector<8x128xbf16>, vector<128x128xbf16>, vector<8x128xf32> -> vector<8x128xf32>
    %12 = arith.addf %9, %11 : vector<8x128xf32>
    %c0_8 = arith.constant 0 : index
    %c0_9 = arith.constant 0 : index
    %13 = vector.load %arg7[%c0_8, %c0_9] : memref<8x128xf32, #tpu.memory_space<vmem>>, vector<8x128xf32>
    tpu.vector_store %arg7[%c0_8, %c0_9], %12 {strides = array<i32>} : memref<8x128xf32, #tpu.memory_space<vmem>>, vector<8x128xf32>,
    %c0_i32_10 = arith.constant 0 : i32
    %14 = arith.cmpi eq, %arg2, %c0_i32_10 : i32
    %15 = arith.extui %14 : i1 to i32
    %c0_i32_11 = arith.constant 0 : i32
    %16 = arith.cmpi ne, %15, %c0_i32_11 : i32
    scf.if %16 {
      %c0_12 = arith.constant 0 : index
      %c0_13 = arith.constant 0 : index
      %17 = vector.load %arg7[%c0_12, %c0_13] : memref<8x128xf32, #tpu.memory_space<vmem>>, vector<8x128xf32>
      %cst_14 = arith.constant 0.000000e+00 : f32
      %18 = vector.broadcast %cst_14 : f32 to vector<8x128xf32>
      %19 = arith.maximumf %17, %18 : vector<8x128xf32>
      %c0_15 = arith.constant 0 : index
      %c0_16 = arith.constant 0 : index
      %20 = vector.load %arg6[%c0_15, %c0_16] : memref<8x128xf32, #tpu.memory_space<vmem>>, vector<8x128xf32>
      tpu.vector_store %arg6[%c0_15, %c0_16], %19 {strides = array<i32>} : memref<8x128xf32, #tpu.memory_space<vmem>>, vector<8x128xf32>,
    } else {
    }
    return
  }
  func.func @transform_0(%arg0: i32, %arg1: i32, %arg2: i32) -> (i32, i32) {
    %c0_i32 = arith.constant 0 : i32
    return %arg0, %arg2 : i32, i32
  }
  func.func @transform_1(%arg0: i32, %arg1: i32, %arg2: i32) -> (i32, i32) {
    %c0_i32 = arith.constant 0 : i32
    %c0_i32_0 = arith.constant 0 : i32
    return %c0_i32, %arg2 : i32, i32
  }
  func.func @transform_2(%arg0: i32, %arg1: i32, %arg2: i32) -> (i32, i32) {
    %c0_i32 = arith.constant 0 : i32
    return %arg2, %arg1 : i32, i32
  }
  func.func @transform_3(%arg0: i32, %arg1: i32, %arg2: i32) -> (i32, i32) {
    %c0_i32 = arith.constant 0 : i32
    return %arg0, %arg1 : i32, i32
  }
}

</mosaic_0001>

<llo_original>
// kernel: tpu_custom_call.1
$region0: #{tpu_custom_call.1}
  #allocation0 [shape = 'u32[]', space=smem, size = 0x4, offset = 0x4, fixed_abs, tag = 'smem constant byte address 0x4 - core index']
  #allocation1 [shape = 'u32[144,128]{1,0:T(1,128)}', space=vmem, size = 0x12000, scoped, tag = 'internal scratch']
  #allocation2 [shape = 'f32[8,128]{1,0:T(8,128)}', space=vmem, size = 0x1000, scoped, tag = 'scratch operand']
  %s0 = inlined_call_operand.hbm [shape: bf16[8,128], index: 0, kind: input, shape index: {}]
  %s1 = inlined_call_operand.vmem [shape: f32[1,128], index: 1, kind: input, shape index: {}]
  %s2 = inlined_call_operand.hbm [shape: bf16[128,128], index: 2, kind: input, shape index: {}]
  %s3 = inlined_call_operand.hbm [shape: f32[8,128], index: 3, kind: output, shape index: {}]
  %s4 = sld [smem:[#allocation0]]
  $region38: #{tpu_custom_call.1} parent=0
    _
  %s6 = ssub.s32 1, %s4
  %s7 = scalar_select 0, %s6, %s4
  $region1: #{tpu_custom_call.1} parent=0
    #allocation3 [shape = 'u8[2048]{0}', space=vmem, size = 0x800, scoped, tag = 'input window, operand 0, single buffered']
    #allocation4 [shape = 's32[1]{0}', space=sflag, size = 0x4, scoped, tag = 'scoped memory for tpu_custom_call.1']
    #allocation5 [shape = 's32[1]{0}', space=sflag, size = 0x4, scoped, tag = 'scoped memory for tpu_custom_call.1']
    #allocation6 [shape = 'u8[32768]{0}', space=vmem, size = 0x8000, scoped, tag = 'input window, operand 2, single buffered']
    #allocation7 [shape = 's32[1]{0}', space=sflag, size = 0x4, scoped, tag = 'scoped memory for tpu_custom_call.1']
    #allocation8 [shape = 'u8[4096]{0}', space=vmem, size = 0x1000, scoped, tag = 'output window, operand 0, single buffered']
    %8 = vsyncpa [#allocation4], 0
    %9 = vsyncpa [#allocation7], 0
    %10 = vsyncpa [#allocation5], 0
    // Predicated region
    $region2: #{tpu_custom_call.1} parent=1 // pred_check
      _
    $region3: #{tpu_custom_call.1} parent=1 // pred_check_branch
      %12 = sbr.rel (0) target = $region5
    $region4: #{tpu_custom_call.1} parent=1 // pred_region
      %s14 = ssub.s32 64, 64
      %15 = vsyncadd [#allocation4], %s14
      %s17 = sshll.u32 [#allocation3], 4
      %s18 = int_to_ptr.vmem [resolvable:$true] %s17
      %20 = dma.hbm_to_vmem [thread:$0]  %s0, 64, %s18, [#allocation4]
    $region5: #{tpu_custom_call.1} parent=1 // pred_fallthru
      _
    // Predicated region
    $region6: #{tpu_custom_call.1} parent=1 // pred_check
      _
    $region7: #{tpu_custom_call.1} parent=1 // pred_check_branch
      %22 = sbr.rel (0) target = $region9
    $region8: #{tpu_custom_call.1} parent=1 // pred_region
      _
    $region9: #{tpu_custom_call.1} parent=1 // pred_fallthru
      _
    // Predicated region
    $region10: #{tpu_custom_call.1} parent=1 // pred_check
      _
    $region11: #{tpu_custom_call.1} parent=1 // pred_check_branch
      %24 = sbr.rel (0) target = $region13
    $region12: #{tpu_custom_call.1} parent=1 // pred_region
      %s26 = ssub.s32 1024, 1024
      %27 = vsyncadd [#allocation7], %s26
      %s28 = sshll.u32 [#allocation6], 4
      %s29 = int_to_ptr.vmem [resolvable:$true] %s28
      %34 = dma.hbm_to_vmem [thread:$0]  %s2, 1024, %s29, [#allocation7], 64, 64, 4
    $region13: #{tpu_custom_call.1} parent=1 // pred_fallthru
      _
    // Predicated region
    $region14: #{tpu_custom_call.1} parent=1 // pred_check
      _
    $region15: #{tpu_custom_call.1} parent=1 // pred_check_branch
      %36 = sbr.rel (0) target = $region17
    $region16: #{tpu_custom_call.1} parent=1 // pred_region
      %37 = dma.done [#allocation4], 64
    $region17: #{tpu_custom_call.1} parent=1 // pred_fallthru
      _
    // Predicated region
    $region18: #{tpu_custom_call.1} parent=1 // pred_check
      _
    $region19: #{tpu_custom_call.1} parent=1 // pred_check_branch
      %39 = sbr.rel (0) target = $region21
    $region20: #{tpu_custom_call.1} parent=1 // pred_region
      %40 = dma.done [#allocation7], 1024
    $region21: #{tpu_custom_call.1} parent=1 // pred_fallthru
      _
    %p42 = scmp.eq.s32.totalorder 0, 0
    // Predicated region
    $region22: #{tpu_custom_call.1} parent=1 // pred_check
      %p43 = pneg %p42
    $region23: #{tpu_custom_call.1} parent=1 // pred_check_branch
      %45 = sbr.rel (%p43) target = $region25
    $region24: #{tpu_custom_call.1} parent=1 // pred_region
      %46 = vst [vmem:[#allocation2] sm:$0xff] 0.0
    $region25: #{tpu_custom_call.1} parent=1 // pred_fallthru
      _
    %v47 = vld [vmem:[#allocation3] sm:$0xf]
    %v48 = vunpack.c.l.bf16 %v47
    %v49 = vld [vmem:[%s1] sm:$0x1]
    %v51 = vlaneseq
    %v52 = vshrl.u32 %v51, 7
    %v53 = vsub.s32 0, %v52
    %v54 = vrot.slane %v49, %v53
    %v56 = vsub.f32 %v48, %v54
    %v57 = vpack.c.bf16 %v56, %v56
    %v58 = vld [vmem:[#allocation2] sm:$0xff]
    %v59 = vld [vmem:[#allocation6] sm:$0xf]
    %v60 = vld [vmem:[#allocation6 + $0x4] sm:$0xf]
    %v61 = vld [vmem:[#allocation6 + $0x8] sm:$0xf]
    %v62 = vld [vmem:[#allocation6 + $0xc] sm:$0xf]
    %v63 = vld [vmem:[#allocation6 + $0x10] sm:$0xf]
    %v64 = vld [vmem:[#allocation6 + $0x14] sm:$0xf]
    %v65 = vld [vmem:[#allocation6 + $0x18] sm:$0xf]
    %v66 = vld [vmem:[#allocation6 + $0x1c] sm:$0xf]
    %v67 = vld [vmem:[#allocation6 + $0x20] sm:$0xf]
    %v68 = vld [vmem:[#allocation6 + $0x24] sm:$0xf]
    %v69 = vld [vmem:[#allocation6 + $0x28] sm:$0xf]
    %v70 = vld [vmem:[#allocation6 + $0x2c] sm:$0xf]
    %v71 = vld [vmem:[#allocation6 + $0x30] sm:$0xf]
    %v72 = vld [vmem:[#allocation6 + $0x34] sm:$0xf]
    %v73 = vld [vmem:[#allocation6 + $0x38] sm:$0xf]
    %v74 = vld [vmem:[#allocation6 + $0x3c] sm:$0xf]
    %v91 = vunpack.c.l.b16 %v59
    %v92 = vunpack.c.l.b16 %v60
    %v93 = vunpack.c.l.b16 %v61
    %v94 = vunpack.c.l.b16 %v62
    %v95 = vunpack.c.l.b16 %v63
    %v96 = vunpack.c.l.b16 %v64
    %v97 = vunpack.c.l.b16 %v65
    %v98 = vunpack.c.l.b16 %v66
    %v99 = vunpack.c.l.b16 %v67
    %v100 = vunpack.c.l.b16 %v68
    %v101 = vunpack.c.l.b16 %v69
    %v102 = vunpack.c.l.b16 %v70
    %v103 = vunpack.c.l.b16 %v71
    %v104 = vunpack.c.l.b16 %v72
    %v105 = vunpack.c.l.b16 %v73
    %v106 = vunpack.c.l.b16 %v74
    %v107 = vpack.c.b16 %v92, %v91
    %v108 = vpack.c.b16 %v94, %v93
    %v109 = vpack.c.b16 %v96, %v95
    %v110 = vpack.c.b16 %v98, %v97
    %v111 = vpack.c.b16 %v100, %v99
    %v112 = vpack.c.b16 %v102, %v101
    %v113 = vpack.c.b16 %v104, %v103
    %v114 = vpack.c.b16 %v106, %v105
    %123 = vmatprep.subr.bf16.mxu0 0
    %124 = vmatpush1.bf16.msra.mxu0 %v107
    %125 = vmatprep.subr.bf16.mxu0 0
    %126 = vmatpush1.bf16.msra.mxu0 %v108
    %127 = vmatprep.subr.bf16.mxu0 0
    %128 = vmatpush1.bf16.msra.mxu0 %v109
    %129 = vmatprep.subr.bf16.mxu0 0
    %130 = vmatpush1.bf16.msra.mxu0 %v110
    %131 = vmatprep.subr.bf16.mxu0 0
    %132 = vmatpush1.bf16.msra.mxu0 %v111
    %133 = vmatprep.subr.bf16.mxu0 0
    %134 = vmatpush1.bf16.msra.mxu0 %v112
    %135 = vmatprep.subr.bf16.mxu0 0
    %136 = vmatpush1.bf16.msra.mxu0 %v113
    %137 = vmatprep.subr.bf16.mxu0 0
    %138 = vmatpush1.bf16.msra.mxu0 %v114
    %139 = vmatprep.subr.bf16.mxu0 0
    %140 = vmatpush1.bf16.msra.mxu0 0
    %141 = vmatprep.subr.bf16.mxu0 0
    %142 = vmatpush1.bf16.msra.mxu0 0
    %143 = vmatprep.subr.bf16.mxu0 0
    %144 = vmatpush1.bf16.msra.mxu0 0
    %145 = vmatprep.subr.bf16.mxu0 0
    %146 = vmatpush1.bf16.msra.mxu0 0
    %147 = vmatprep.subr.bf16.mxu0 0
    %148 = vmatpush1.bf16.msra.mxu0 0
    %149 = vmatprep.subr.bf16.mxu0 0
    %150 = vmatpush1.bf16.msra.mxu0 0
    %151 = vmatprep.subr.bf16.mxu0 0
    %152 = vmatpush1.bf16.msra.mxu0 0
    %153 = vmatprep.subr.bf16.mxu0 0
    %154 = vmatpush1.bf16.msra.mxu0 0
    %155 = vmatprep.mubr.bf16.mxu0 0
    %156 = vmatmul.mubr.bf16.gmra.mrb[0].mxu0 %v57
    %v157 = vpop.f32.mrb[0].mxu0
    %v158 = vadd.f32 0.0, %v157
    %v159 = vpop.f32.mrb[0].mxu0
    %v160 = vpop.f32.mrb[0].mxu0
    %v161 = vpop.f32.mrb[0].mxu0
    %162 = vdwg.mxu0
    %v163 = vadd.f32 %v58, %v158
    %164 = vst [vmem:[#allocation2] sm:$0xff] %v163
    // Predicated region
    $region26: #{tpu_custom_call.1} parent=1 // pred_check
      %p165 = pneg %p42
    $region27: #{tpu_custom_call.1} parent=1 // pred_check_branch
      %167 = sbr.rel (%p165) target = $region29
    $region28: #{tpu_custom_call.1} parent=1 // pred_region
      %v168 = vld [vmem:[#allocation2] sm:$0xff]
      %v169 = vmax.f32 %v168, 0.0
      %170 = vst [vmem:[#allocation8] sm:$0xff] %v169
    $region29: #{tpu_custom_call.1} parent=1 // pred_fallthru
      _
    // Predicated region
    $region30: #{tpu_custom_call.1} parent=1 // pred_check
      _
    $region31: #{tpu_custom_call.1} parent=1 // pred_check_branch
      %172 = sbr.rel (0) target = $region33
    $region32: #{tpu_custom_call.1} parent=1 // pred_region
      %s174 = ssub.s32 128, 128
      %175 = vsyncadd [#allocation5], %s174
      %s177 = sshll.u32 [#allocation8], 4
      %s178 = int_to_ptr.vmem [resolvable:$true] %s177
      %180 = dma.vmem_to_hbm [thread:$0]  %s178, 128, %s3, [#allocation5]
    $region33: #{tpu_custom_call.1} parent=1 // pred_fallthru
      _
    // Predicated region
    $region34: #{tpu_custom_call.1} parent=1 // pred_check
      _
    $region35: #{tpu_custom_call.1} parent=1 // pred_check_branch
      %182 = sbr.rel (0) target = $region37
    $region36: #{tpu_custom_call.1} parent=1 // pred_region
      %183 = dma.done [#allocation5], 128
    $region37: #{tpu_custom_call.1} parent=1 // pred_fallthru
      _
    %184 = vsyncpa [#allocation4], 1
    %185 = vsyncpa [#allocation7], 1
    %186 = vsyncpa [#allocation5], 1

</llo_original>
